<compile_context>
chip_gen: v7x
topology: tpu7x:2x2x1
jax: 0.10.0
libtpu: 0.0.40
codegen_flags: <defaults>
</compile_context>

<pallas_src>
import jax
import jax.numpy as jnp
from jax.experimental import pallas as pl
from jax.experimental.pallas import tpu as pltpu

LANE = 128


def _round_up(x, m):
    return ((x + m - 1) // m) * m


def dqn_kernel(x_ref,
               w1_ref, b1_ref,
               w2_ref, b2_ref,
               w3_ref, b3_ref,
               w4_ref, b4_ref,
               out_ref):
    # One (TB, input_dim) batch tile per grid step. All four layers fused,
    # straight-line. Matmuls accumulate in f32; bias-add / ReLU stay in f32
    # (v5e has no bf16 VPU); MXU inputs follow the weight dtype.
    x = x_ref[...].astype(w1_ref.dtype)

    h1 = jnp.dot(x, w1_ref[...], preferred_element_type=jnp.float32) + b1_ref[...]
    h1 = jnp.maximum(h1, 0.0)

    h2 = jnp.dot(h1.astype(w2_ref.dtype), w2_ref[...],
                 preferred_element_type=jnp.float32) + b2_ref[...]
    h2 = jnp.maximum(h2, 0.0)

    h3 = jnp.dot(h2.astype(w3_ref.dtype), w3_ref[...],
                 preferred_element_type=jnp.float32) + b3_ref[...]
    h3 = jnp.maximum(h3, 0.0)

    acts = jnp.dot(h3.astype(w4_ref.dtype), w4_ref[...],
                   preferred_element_type=jnp.float32) + b4_ref[...]
    # Lane-dense (multiple-of-128) store; padded action columns are sliced
    # off in the wrapper.
    out_ref[...] = acts.astype(out_ref.dtype)


def dqn_forward(state, params, *, block_batch=1024, use_bf16=False):
    """state: (B, input_dim) float32. params: dict of pre-transposed weights."""
    B, input_dim = state.shape
    n_actions = params["b4"].shape[-1]

    # --- lane-dense output padding: n_actions -> multiple of 128 -------------
    n_out_pad = _round_up(n_actions, LANE)
    w4, b4 = params["w4"], params["b4"]
    if n_out_pad != n_actions:
        w4 = jnp.pad(w4, ((0, 0), (0, n_out_pad - n_actions)))
        b4 = jnp.pad(b4, ((0, 0), (0, n_out_pad - n_actions)))

    weights = [params["w1"], params["w2"], params["w3"], w4]
    biases = [params["b1"], params["b2"], params["b3"], b4]
    if use_bf16:
        # bf16 MXU inputs (full-rate on v6e/v7x); biases stay f32 so the
        # bias-add / ReLU path is f32 everywhere.
        weights = [w.astype(jnp.bfloat16) for w in weights]

    # --- batch tiling ---------------------------------------------------------
    # TB is a multiple of 8 (sublane-aligned), capped at block_batch. Per-step
    # live set ~ TB*(16+128+128+64+128)*4B -> ~1.9 MiB at TB=1024, comfortably
    # inside scoped VMEM on v5e/v6e (128 MiB) and v7x (64 MiB).
    TB = min(block_batch, _round_up(B, 8))
    B_pad = _round_up(B, TB)

    x = state.astype(jnp.bfloat16) if use_bf16 else state
    if B_pad != B:
        x = jnp.pad(x, ((0, B_pad - B), (0, 0)))  # tail-tile padding

    grid = (B_pad // TB,)

    def resident(arr):
        # Full-shape block with a constant index_map: fetched once, stays in
        # VMEM for every grid step.
        ndim = arr.ndim
        return pl.BlockSpec(arr.shape, lambda i, _n=ndim: (0,) * _n)

    in_specs = [pl.BlockSpec((TB, input_dim), lambda i: (i, 0))]
    for w, b in zip(weights, biases):
        in_specs.append(resident(w))
        in_specs.append(resident(b))

    out = pl.pallas_call(
        dqn_kernel,
        out_shape=jax.ShapeDtypeStruct((B_pad, n_out_pad), jnp.float32),
        grid=grid,
        in_specs=in_specs,
        out_specs=pl.BlockSpec((TB, n_out_pad), lambda i: (i, 0)),
        compiler_params=pltpu.CompilerParams(
            dimension_semantics=("parallel",)),  # v7x: shard batch over 2 TCs
    )(
        x,
        weights[0], biases[0],
        weights[1], biases[1],
        weights[2], biases[2],
        weights[3], biases[3],
    )

    return out[:B, :n_actions]


def init_params(key, input_dim, n_actions):
    """Deterministic init mimicking nn.Linear's uniform(-1/sqrt(fan_in), ...).
    Weights stored as (in_features, out_features), biases as (1, out)."""
    dims = [(input_dim, 128), (128, 128), (128, 64), (64, n_actions)]
    params = {}
    for i, (fan_in, fan_out) in enumerate(dims, start=1):
        key, kw, kb = jax.random.split(key, 3)
        bound = 1.0 / jnp.sqrt(jnp.float32(fan_in))
        params[f"w{i}"] = jax.random.uniform(
            kw, (fan_in, fan_out), jnp.float32, minval=-bound, maxval=bound)
        params[f"b{i}"] = jax.random.uniform(
            kb, (1, fan_out), jnp.float32, minval=-bound, maxval=bound)
    return params


def dqn_forward_ref(state, params):
    """Pure-JAX reference for correctness checking."""
    h = state
    for i in range(1, 4):
        h = jnp.maximum(h @ params[f"w{i}"] + params[f"b{i}"], 0.0)
    return h @ params["w4"] + params["b4"]


if __name__ == "__main__":
    key = jax.random.PRNGKey(0)
    input_dim, n_actions = 16, 4
    params = init_params(key, input_dim, n_actions)

    # Case 1: small aligned batch.
    key, k1 = jax.random.split(key)
    state = jax.random.normal(k1, (8, input_dim), jnp.float32)
    actions = jax.block_until_ready(dqn_forward(state, params))
    expected = dqn_forward_ref(state, params)
    assert actions.shape == (8, n_actions)
    assert jnp.allclose(actions, expected, atol=1e-5, rtol=1e-5)

    # Case 2: batch not a multiple of the tile (exercises tail padding).
    key, k2 = jax.random.split(key)
    state2 = jax.random.normal(k2, (13, input_dim), jnp.float32)
    actions2 = jax.block_until_ready(dqn_forward(state2, params))
    expected2 = dqn_forward_ref(state2, params)
    assert actions2.shape == (13, n_actions)
    assert jnp.allclose(actions2, expected2, atol=1e-5, rtol=1e-5)

    # TODO(synk): loss()/optimizer/checkpoint methods of the PyTorch module are
    # training utilities, not part of the forward pass, and are not kernelized.

    print("KERNEL_OK")
</pallas_src>

<mosaic_0001>
module attributes {stable_mosaic.version = 11 : i64} {
  func.func @dqn_kernel(%arg0: i32, %arg1: memref<8x16xf32, #tpu.memory_space<vmem>>, %arg2: memref<16x128xf32, #tpu.memory_space<vmem>>, %arg3: memref<1x128xf32, #tpu.memory_space<vmem>>, %arg4: memref<128x128xf32, #tpu.memory_space<vmem>>, %arg5: memref<1x128xf32, #tpu.memory_space<vmem>>, %arg6: memref<128x64xf32, #tpu.memory_space<vmem>>, %arg7: memref<1x64xf32, #tpu.memory_space<vmem>>, %arg8: memref<64x128xf32, #tpu.memory_space<vmem>>, %arg9: memref<1x128xf32, #tpu.memory_space<vmem>>, %arg10: memref<8x128xf32, #tpu.memory_space<vmem>>) attributes {dimension_semantics = [#tpu.dimension_semantics<parallel>], iteration_bounds = array<i64: 1>, scalar_prefetch = 0 : i64, scratch_operands = 0 : i64, tpu.core_type = #tpu.core_type<tc>, window_params = [{transform_indices = @transform_0, window_bounds = array<i64: 8, 16>}, {pipeline_mode = #tpu.pipeline_mode<synchronous>, transform_indices = @transform_1, window_bounds = array<i64: 16, 128>}, {pipeline_mode = #tpu.pipeline_mode<synchronous>, transform_indices = @transform_2, window_bounds = array<i64: 1, 128>}, {pipeline_mode = #tpu.pipeline_mode<synchronous>, transform_indices = @transform_3, window_bounds = array<i64: 128, 128>}, {pipeline_mode = #tpu.pipeline_mode<synchronous>, transform_indices = @transform_4, window_bounds = array<i64: 1, 128>}, {pipeline_mode = #tpu.pipeline_mode<synchronous>, transform_indices = @transform_5, window_bounds = array<i64: 128, 64>}, {pipeline_mode = #tpu.pipeline_mode<synchronous>, transform_indices = @transform_6, window_bounds = array<i64: 1, 64>}, {pipeline_mode = #tpu.pipeline_mode<synchronous>, transform_indices = @transform_7, window_bounds = array<i64: 64, 128>}, {pipeline_mode = #tpu.pipeline_mode<synchronous>, transform_indices = @transform_8, window_bounds = array<i64: 1, 128>}, {transform_indices = @transform_9, window_bounds = array<i64: 8, 128>}]} {
    %c0 = arith.constant 0 : index
    %c0_0 = arith.constant 0 : index
    %0 = vector.load %arg1[%c0, %c0_0] : memref<8x16xf32, #tpu.memory_space<vmem>>, vector<8x16xf32>
    %c0_1 = arith.constant 0 : index
    %c0_2 = arith.constant 0 : index
    %1 = vector.load %arg2[%c0_1, %c0_2] : memref<16x128xf32, #tpu.memory_space<vmem>>, vector<16x128xf32>
    %cst = arith.constant dense<0.000000e+00> : vector<8x128xf32>
    %2 = tpu.matmul %0, %1, %cst {dimension_numbers = #tpu.dot_dimension_numbers<[1], [0], [0], [1], [0, 0, 1, 1], [], []>} : vector<8x16xf32>, vector<16x128xf32>, vector<8x128xf32> -> vector<8x128xf32>
    %c0_3 = arith.constant 0 : index
    %c0_4 = arith.constant 0 : index
    %3 = vector.load %arg3[%c0_3, %c0_4] : memref<1x128xf32, #tpu.memory_space<vmem>>, vector<1x128xf32>
    %4 = vector.broadcast %3 : vector<1x128xf32> to vector<8x128xf32>
    %5 = arith.addf %2, %4 : vector<8x128xf32>
    %cst_5 = arith.constant 0.000000e+00 : f32
    %6 = vector.broadcast %cst_5 : f32 to vector<8x128xf32>
    %7 = arith.maximumf %5, %6 : vector<8x128xf32>
    %c0_6 = arith.constant 0 : index
    %c0_7 = arith.constant 0 : index
    %8 = vector.load %arg4[%c0_6, %c0_7] : memref<128x128xf32, #tpu.memory_space<vmem>>, vector<128x128xf32>
    %cst_8 = arith.constant dense<0.000000e+00> : vector<8x128xf32>
    %9 = tpu.matmul %7, %8, %cst_8 {dimension_numbers = #tpu.dot_dimension_numbers<[1], [0], [0], [1], [0, 0, 1, 1], [], []>} : vector<8x128xf32>, vector<128x128xf32>, vector<8x128xf32> -> vector<8x128xf32>
    %c0_9 = arith.constant 0 : index
    %c0_10 = arith.constant 0 : index
    %10 = vector.load %arg5[%c0_9, %c0_10] : memref<1x128xf32, #tpu.memory_space<vmem>>, vector<1x128xf32>
    %11 = vector.broadcast %10 : vector<1x128xf32> to vector<8x128xf32>
    %12 = arith.addf %9, %11 : vector<8x128xf32>
    %cst_11 = arith.constant 0.000000e+00 : f32
    %13 = vector.broadcast %cst_11 : f32 to vector<8x128xf32>
    %14 = arith.maximumf %12, %13 : vector<8x128xf32>
    %c0_12 = arith.constant 0 : index
    %c0_13 = arith.constant 0 : index
    %15 = vector.load %arg6[%c0_12, %c0_13] : memref<128x64xf32, #tpu.memory_space<vmem>>, vector<128x64xf32>
    %cst_14 = arith.constant dense<0.000000e+00> : vector<8x64xf32>
    %16 = tpu.matmul %14, %15, %cst_14 {dimension_numbers = #tpu.dot_dimension_numbers<[1], [0], [0], [1], [0, 0, 1, 1], [], []>} : vector<8x128xf32>, vector<128x64xf32>, vector<8x64xf32> -> vector<8x64xf32>
    %c0_15 = arith.constant 0 : index
    %c0_16 = arith.constant 0 : index
    %17 = vector.load %arg7[%c0_15, %c0_16] : memref<1x64xf32, #tpu.memory_space<vmem>>, vector<1x64xf32>
    %18 = vector.broadcast %17 : vector<1x64xf32> to vector<8x64xf32>
    %19 = arith.addf %16, %18 : vector<8x64xf32>
    %cst_17 = arith.constant 0.000000e+00 : f32
    %20 = vector.broadcast %cst_17 : f32 to vector<8x64xf32>
    %21 = arith.maximumf %19, %20 : vector<8x64xf32>
    %c0_18 = arith.constant 0 : index
    %c0_19 = arith.constant 0 : index
    %22 = vector.load %arg8[%c0_18, %c0_19] : memref<64x128xf32, #tpu.memory_space<vmem>>, vector<64x128xf32>
    %cst_20 = arith.constant dense<0.000000e+00> : vector<8x128xf32>
    %23 = tpu.matmul %21, %22, %cst_20 {dimension_numbers = #tpu.dot_dimension_numbers<[1], [0], [0], [1], [0, 0, 1, 1], [], []>} : vector<8x64xf32>, vector<64x128xf32>, vector<8x128xf32> -> vector<8x128xf32>
    %c0_21 = arith.constant 0 : index
    %c0_22 = arith.constant 0 : index
    %24 = vector.load %arg9[%c0_21, %c0_22] : memref<1x128xf32, #tpu.memory_space<vmem>>, vector<1x128xf32>
    %25 = vector.broadcast %24 : vector<1x128xf32> to vector<8x128xf32>
    %26 = arith.addf %23, %25 : vector<8x128xf32>
    %c0_23 = arith.constant 0 : index
    %c0_24 = arith.constant 0 : index
    %27 = vector.load %arg10[%c0_23, %c0_24] : memref<8x128xf32, #tpu.memory_space<vmem>>, vector<8x128xf32>
    tpu.vector_store %arg10[%c0_23, %c0_24], %26 {strides = array<i32>} : memref<8x128xf32, #tpu.memory_space<vmem>>, vector<8x128xf32>,
    return
  }
  func.func @transform_0(%arg0: i32) -> (i32, i32) {
    %c0_i32 = arith.constant 0 : i32
    %c0_i32_0 = arith.constant 0 : i32
    return %arg0, %c0_i32 : i32, i32
  }
  func.func @transform_1(%arg0: i32) -> (i32, i32) {
    %c0_i32 = arith.constant 0 : i32
    %c0_i32_0 = arith.constant 0 : i32
    %c0_i32_1 = arith.constant 0 : i32
    return %c0_i32, %c0_i32_0 : i32, i32
  }
  func.func @transform_2(%arg0: i32) -> (i32, i32) {
    %c0_i32 = arith.constant 0 : i32
    %c0_i32_0 = arith.constant 0 : i32
    %c0_i32_1 = arith.constant 0 : i32
    return %c0_i32, %c0_i32_0 : i32, i32
  }
  func.func @transform_3(%arg0: i32) -> (i32, i32) {
    %c0_i32 = arith.constant 0 : i32
    %c0_i32_0 = arith.constant 0 : i32
    %c0_i32_1 = arith.constant 0 : i32
    return %c0_i32, %c0_i32_0 : i32, i32
  }
  func.func @transform_4(%arg0: i32) -> (i32, i32) {
    %c0_i32 = arith.constant 0 : i32
    %c0_i32_0 = arith.constant 0 : i32
    %c0_i32_1 = arith.constant 0 : i32
    return %c0_i32, %c0_i32_0 : i32, i32
  }
  func.func @transform_5(%arg0: i32) -> (i32, i32) {
    %c0_i32 = arith.constant 0 : i32
    %c0_i32_0 = arith.constant 0 : i32
    %c0_i32_1 = arith.constant 0 : i32
    return %c0_i32, %c0_i32_0 : i32, i32
  }
  func.func @transform_6(%arg0: i32) -> (i32, i32) {
    %c0_i32 = arith.constant 0 : i32
    %c0_i32_0 = arith.constant 0 : i32
    %c0_i32_1 = arith.constant 0 : i32
    return %c0_i32, %c0_i32_0 : i32, i32
  }
  func.func @transform_7(%arg0: i32) -> (i32, i32) {
    %c0_i32 = arith.constant 0 : i32
    %c0_i32_0 = arith.constant 0 : i32
    %c0_i32_1 = arith.constant 0 : i32
    return %c0_i32, %c0_i32_0 : i32, i32
  }
  func.func @transform_8(%arg0: i32) -> (i32, i32) {
    %c0_i32 = arith.constant 0 : i32
    %c0_i32_0 = arith.constant 0 : i32
    %c0_i32_1 = arith.constant 0 : i32
    return %c0_i32, %c0_i32_0 : i32, i32
  }
  func.func @transform_9(%arg0: i32) -> (i32, i32) {
    %c0_i32 = arith.constant 0 : i32
    %c0_i32_0 = arith.constant 0 : i32
    return %arg0, %c0_i32 : i32, i32
  }
}

</mosaic_0001>

<llo_original>
// kernel: tpu_custom_call.1
$region0: #{tpu_custom_call.1}
  #allocation0 [shape = 'u32[]', space=smem, size = 0x4, offset = 0x4, fixed_abs, tag = 'smem constant byte address 0x4 - core index']
  #allocation1 [shape = 'u32[144,128]{1,0:T(1,128)}', space=vmem, size = 0x12000, scoped, tag = 'internal scratch']
  %s0 = inlined_call_operand.vmem [shape: f32[8,16], index: 0, kind: input, shape index: {}]
  %s1 = inlined_call_operand.hbm [shape: f32[16,128], index: 1, kind: input, shape index: {}]
  %s2 = inlined_call_operand.vmem [shape: f32[1,128], index: 2, kind: input, shape index: {}]
  %s3 = inlined_call_operand.vmem [shape: f32[128,128], index: 3, kind: input, shape index: {}]
  %s4 = inlined_call_operand.vmem [shape: f32[1,128], index: 4, kind: input, shape index: {}]
  %s5 = inlined_call_operand.vmem [shape: f32[128,64], index: 5, kind: input, shape index: {}]
  %s6 = inlined_call_operand.vmem [shape: f32[1,64], index: 6, kind: input, shape index: {}]
  %s7 = inlined_call_operand.vmem [shape: f32[64,128], index: 7, kind: input, shape index: {}]
  %s8 = inlined_call_operand.vmem [shape: f32[1,128], index: 8, kind: input, shape index: {}]
  %s9 = inlined_call_operand.hbm [shape: f32[8,128], index: 9, kind: output, shape index: {}]
  %s10 = sld [smem:[#allocation0]]
  $region50: #{tpu_custom_call.1} parent=0
    _
  %s12 = ssub.s32 1, %s10
  %s13 = scalar_select 0, %s12, %s10
  $region1: #{tpu_custom_call.1} parent=0
    #allocation2 [shape = 'u8[8192]{0}', space=vmem, size = 0x2000, scoped, tag = 'input window, operand 1, single buffered']
    #allocation3 [shape = 's32[1]{0}', space=sflag, size = 0x4, scoped, tag = 'scoped memory for tpu_custom_call.1']
    #allocation4 [shape = 's32[1]{0}', space=sflag, size = 0x4, scoped, tag = 'scoped memory for tpu_custom_call.1']
    #allocation5 [shape = 'u8[4096]{0}', space=vmem, size = 0x1000, scoped, tag = 'output window, operand 0, single buffered']
    %14 = vsyncpa [#allocation3], 0
    %15 = vsyncpa [#allocation4], 0
    // Predicated region
    $region2: #{tpu_custom_call.1} parent=1 // pred_check
      _
    $region3: #{tpu_custom_call.1} parent=1 // pred_check_branch
      %17 = sbr.rel (0) target = $region5
    $region4: #{tpu_custom_call.1} parent=1 // pred_region
      _
    $region5: #{tpu_custom_call.1} parent=1 // pred_fallthru
      _
    // Predicated region
    $region6: #{tpu_custom_call.1} parent=1 // pred_check
      _
    $region7: #{tpu_custom_call.1} parent=1 // pred_check_branch
      %19 = sbr.rel (0) target = $region9
    $region8: #{tpu_custom_call.1} parent=1 // pred_region
      %s21 = ssub.s32 256, 256
      %22 = vsyncadd [#allocation3], %s21
      %s23 = sshll.u32 [#allocation2], 4
      %s24 = int_to_ptr.vmem [resolvable:$true] %s23
      %29 = dma.hbm_to_vmem [thread:$0]  %s1, 256, %s24, [#allocation3], 128, 128, 8
    $region9: #{tpu_custom_call.1} parent=1 // pred_fallthru
      _
    // Predicated region
    $region10: #{tpu_custom_call.1} parent=1 // pred_check
      _
    $region11: #{tpu_custom_call.1} parent=1 // pred_check_branch
      %31 = sbr.rel (0) target = $region13
    $region12: #{tpu_custom_call.1} parent=1 // pred_region
      _
    $region13: #{tpu_custom_call.1} parent=1 // pred_fallthru
      _
    // Predicated region
    $region14: #{tpu_custom_call.1} parent=1 // pred_check
      _
    $region15: #{tpu_custom_call.1} parent=1 // pred_check_branch
      %33 = sbr.rel (0) target = $region17
    $region16: #{tpu_custom_call.1} parent=1 // pred_region
      _
    $region17: #{tpu_custom_call.1} parent=1 // pred_fallthru
      _
    // Predicated region
    $region18: #{tpu_custom_call.1} parent=1 // pred_check
      _
    $region19: #{tpu_custom_call.1} parent=1 // pred_check_branch
      %35 = sbr.rel (0) target = $region21
    $region20: #{tpu_custom_call.1} parent=1 // pred_region
      _
    $region21: #{tpu_custom_call.1} parent=1 // pred_fallthru
      _
    // Predicated region
    $region22: #{tpu_custom_call.1} parent=1 // pred_check
      _
    $region23: #{tpu_custom_call.1} parent=1 // pred_check_branch
      %37 = sbr.rel (0) target = $region25
    $region24: #{tpu_custom_call.1} parent=1 // pred_region
      _
    $region25: #{tpu_custom_call.1} parent=1 // pred_fallthru
      _
    // Predicated region
    $region26: #{tpu_custom_call.1} parent=1 // pred_check
      _
    $region27: #{tpu_custom_call.1} parent=1 // pred_check_branch
      %39 = sbr.rel (0) target = $region29
    $region28: #{tpu_custom_call.1} parent=1 // pred_region
      _
    $region29: #{tpu_custom_call.1} parent=1 // pred_fallthru
      _
    // Predicated region
    $region30: #{tpu_custom_call.1} parent=1 // pred_check
      _
    $region31: #{tpu_custom_call.1} parent=1 // pred_check_branch
      %41 = sbr.rel (0) target = $region33
    $region32: #{tpu_custom_call.1} parent=1 // pred_region
      _
    $region33: #{tpu_custom_call.1} parent=1 // pred_fallthru
      _
    // Predicated region
    $region34: #{tpu_custom_call.1} parent=1 // pred_check
      _
    $region35: #{tpu_custom_call.1} parent=1 // pred_check_branch
      %43 = sbr.rel (0) target = $region37
    $region36: #{tpu_custom_call.1} parent=1 // pred_region
      _
    $region37: #{tpu_custom_call.1} parent=1 // pred_fallthru
      _
    // Predicated region
    $region38: #{tpu_custom_call.1} parent=1 // pred_check
      _
    $region39: #{tpu_custom_call.1} parent=1 // pred_check_branch
      %45 = sbr.rel (0) target = $region41
    $region40: #{tpu_custom_call.1} parent=1 // pred_region
      %46 = dma.done [#allocation3], 256
    $region41: #{tpu_custom_call.1} parent=1 // pred_fallthru
      _
    %v47 = vld [vmem:[%s0] sm:$0xff]
    %v48 = vld [vmem:[#allocation2] sm:$0xff]
    %v49 = vld [vmem:[#allocation2 + $0x8] sm:$0xff]
    %v50 = vld [vmem:[%s2] sm:$0x1]
    %v52 = vlaneseq
    %v53 = vshrl.u32 %v52, 7
    %v54 = vsub.s32 0, %v53
    %v55 = vrot.slane %v50, %v54
    %vm57 = vcmask 130048
    %v59 = vsel %vm57, %v47, 0
    %61 = vmatprep.subr.mxu0 0.0
    %62 = vmatpush1.msra.mxu0 %v48
    %63 = vmatprep.subr.mxu0 0.0
    %64 = vmatpush1.msra.mxu0 %v49
    %65 = vmatprep.subr.mxu0 0.0
    %66 = vmatpush1.msra.mxu0 0.0
    %67 = vmatprep.subr.mxu0 0.0
    %68 = vmatpush1.msra.mxu0 0.0
    %69 = vmatprep.subr.mxu0 0.0
    %70 = vmatpush1.msra.mxu0 0.0
    %71 = vmatprep.subr.mxu0 0.0
    %72 = vmatpush1.msra.mxu0 0.0
    %73 = vmatprep.subr.mxu0 0.0
    %74 = vmatpush1.msra.mxu0 0.0
    %75 = vmatprep.subr.mxu0 0.0
    %76 = vmatpush1.msra.mxu0 0.0
    %77 = vmatprep.subr.mxu0 0.0
    %78 = vmatpush1.msra.mxu0 0.0
    %79 = vmatprep.subr.mxu0 0.0
    %80 = vmatpush1.msra.mxu0 0.0
    %81 = vmatprep.subr.mxu0 0.0
    %82 = vmatpush1.msra.mxu0 0.0
    %83 = vmatprep.subr.mxu0 0.0
    %84 = vmatpush1.msra.mxu0 0.0
    %85 = vmatprep.subr.mxu0 0.0
    %86 = vmatpush1.msra.mxu0 0.0
    %87 = vmatprep.subr.mxu0 0.0
    %88 = vmatpush1.msra.mxu0 0.0
    %89 = vmatprep.subr.mxu0 0.0
    %90 = vmatpush1.msra.mxu0 0.0
    %91 = vmatprep.subr.mxu0 0.0
    %92 = vmatpush1.msra.mxu0 0.0
    %93 = vmatprep.subr.mxu0 0.0
    %94 = vmatpush1.msra.mxu0 0.0
    %95 = vmatprep.subr.mxu0 0.0
    %96 = vmatpush1.msra.mxu0 0.0
    %97 = vmatprep.subr.mxu0 0.0
    %98 = vmatpush1.msra.mxu0 0.0
    %99 = vmatprep.subr.mxu0 0.0
    %100 = vmatpush1.msra.mxu0 0.0
    %101 = vmatprep.subr.mxu0 0.0
    %102 = vmatpush1.msra.mxu0 0.0
    %103 = vmatprep.subr.mxu0 0.0
    %104 = vmatpush1.msra.mxu0 0.0
    %105 = vmatprep.subr.mxu0 0.0
    %106 = vmatpush1.msra.mxu0 0.0
    %107 = vmatprep.subr.mxu0 0.0
    %108 = vmatpush1.msra.mxu0 0.0
    %109 = vmatprep.subr.mxu0 0.0
    %110 = vmatpush1.msra.mxu0 0.0
    %111 = vmatprep.subr.mxu0 0.0
    %112 = vmatpush1.msra.mxu0 0.0
    %113 = vmatprep.subr.mxu0 0.0
    %114 = vmatpush1.msra.mxu0 0.0
    %115 = vmatprep.subr.mxu0 0.0
    %116 = vmatpush1.msra.mxu0 0.0
    %117 = vmatprep.subr.mxu0 0.0
    %118 = vmatpush1.msra.mxu0 0.0
    %119 = vmatprep.subr.mxu0 0.0
    %120 = vmatpush1.msra.mxu0 0.0
    %121 = vmatprep.subr.mxu0 0.0
    %122 = vmatpush1.msra.mxu0 0.0
    %123 = vmatprep.subr.mxu0 0.0
    %124 = vmatpush1.msra.mxu0 0.0
    %125 = vmatprep.mubr.f32.mxu0 0.0
    %126 = vmatmul.mubr.f32.gmra.mrb[0].mxu0 %v59
    %v127 = vpop.f32.mrb[0].mxu0
    %v128 = vadd.f32 %v55, %v127
    %v129 = vpop.f32.mrb[0].mxu0
    %130 = vdwg.mxu0
    %v131 = vmax.f32 %v128, 0.0
    %v132 = vld [vmem:[%s3] sm:$0xff]
    %v133 = vld [vmem:[%s3 + $0x8] sm:$0xff]
    %v134 = vld [vmem:[%s3 + $0x10] sm:$0xff]
    %v135 = vld [vmem:[%s3 + $0x18] sm:$0xff]
    %v136 = vld [vmem:[%s3 + $0x20] sm:$0xff]
    %v137 = vld [vmem:[%s3 + $0x28] sm:$0xff]
    %v138 = vld [vmem:[%s3 + $0x30] sm:$0xff]
    %v139 = vld [vmem:[%s3 + $0x38] sm:$0xff]
    %v140 = vld [vmem:[%s3 + $0x40] sm:$0xff]
    %v141 = vld [vmem:[%s3 + $0x48] sm:$0xff]
    %v142 = vld [vmem:[%s3 + $0x50] sm:$0xff]
    %v143 = vld [vmem:[%s3 + $0x58] sm:$0xff]
    %v144 = vld [vmem:[%s3 + $0x60] sm:$0xff]
    %v145 = vld [vmem:[%s3 + $0x68] sm:$0xff]
    %v146 = vld [vmem:[%s3 + $0x70] sm:$0xff]
    %v147 = vld [vmem:[%s3 + $0x78] sm:$0xff]
    %v148 = vld [vmem:[%s4] sm:$0x1]
    %v150 = vlaneseq
    %v151 = vshrl.u32 %v150, 7
    %v152 = vsub.s32 0, %v151
    %v153 = vrot.slane %v148, %v152
    %155 = vmatprep.subr.mxu0 0.0
    %156 = vmatpush1.msra.mxu0 %v132
    %157 = vmatprep.subr.mxu0 0.0
    %158 = vmatpush1.msra.mxu0 %v133
    %159 = vmatprep.subr.mxu0 0.0
    %160 = vmatpush1.msra.mxu0 %v134
    %161 = vmatprep.subr.mxu0 0.0
    %162 = vmatpush1.msra.mxu0 %v135
    %163 = vmatprep.subr.mxu0 0.0
    %164 = vmatpush1.msra.mxu0 %v136
    %165 = vmatprep.subr.mxu0 0.0
    %166 = vmatpush1.msra.mxu0 %v137
    %167 = vmatprep.subr.mxu0 0.0
    %168 = vmatpush1.msra.mxu0 %v138
    %169 = vmatprep.subr.mxu0 0.0
    %170 = vmatpush1.msra.mxu0 %v139
    %171 = vmatprep.subr.mxu0 0.0
    %172 = vmatpush1.msra.mxu0 %v140
    %173 = vmatprep.subr.mxu0 0.0
    %174 = vmatpush1.msra.mxu0 %v141
    %175 = vmatprep.subr.mxu0 0.0
    %176 = vmatpush1.msra.mxu0 %v142
    %177 = vmatprep.subr.mxu0 0.0
    %178 = vmatpush1.msra.mxu0 %v143
    %179 = vmatprep.subr.mxu0 0.0
    %180 = vmatpush1.msra.mxu0 %v144
    %181 = vmatprep.subr.mxu0 0.0
    %182 = vmatpush1.msra.mxu0 %v145
    %183 = vmatprep.subr.mxu0 0.0
    %184 = vmatpush1.msra.mxu0 %v146
    %185 = vmatprep.subr.mxu0 0.0
    %186 = vmatpush1.msra.mxu0 %v147
    %187 = vmatprep.subr.mxu0 0.0
    %188 = vmatpush1.msra.mxu0 0.0
    %189 = vmatprep.subr.mxu0 0.0
    %190 = vmatpush1.msra.mxu0 0.0
    %191 = vmatprep.subr.mxu0 0.0
    %192 = vmatpush1.msra.mxu0 0.0
    %193 = vmatprep.subr.mxu0 0.0
    %194 = vmatpush1.msra.mxu0 0.0
    %195 = vmatprep.subr.mxu0 0.0
    %196 = vmatpush1.msra.mxu0 0.0
    %197 = vmatprep.subr.mxu0 0.0
    %198 = vmatpush1.msra.mxu0 0.0
    %199 = vmatprep.subr.mxu0 0.0
    %200 = vmatpush1.msra.mxu0 0.0
    %201 = vmatprep.subr.mxu0 0.0
    %202 = vmatpush1.msra.mxu0 0.0
    %203 = vmatprep.subr.mxu0 0.0
    %204 = vmatpush1.msra.mxu0 0.0
    %205 = vmatprep.subr.mxu0 0.0
    %206 = vmatpush1.msra.mxu0 0.0
    %207 = vmatprep.subr.mxu0 0.0
    %208 = vmatpush1.msra.mxu0 0.0
    %209 = vmatprep.subr.mxu0 0.0
    %210 = vmatpush1.msra.mxu0 0.0
    %211 = vmatprep.subr.mxu0 0.0
    %212 = vmatpush1.msra.mxu0 0.0
    %213 = vmatprep.subr.mxu0 0.0
    %214 = vmatpush1.msra.mxu0 0.0
    %215 = vmatprep.subr.mxu0 0.0
    %216 = vmatpush1.msra.mxu0 0.0
    %217 = vmatprep.subr.mxu0 0.0
    %218 = vmatpush1.msra.mxu0 0.0
    %219 = vmatprep.mubr.f32.mxu0 0.0
    %220 = vmatmul.mubr.f32.gmra.mrb[0].mxu0 %v131
    %v221 = vpop.f32.mrb[0].mxu0
    %v222 = vadd.f32 %v153, %v221
    %v223 = vpop.f32.mrb[0].mxu0
    %224 = vdwg.mxu0
    %v225 = vmax.f32 %v222, 0.0
    %v226 = vld [vmem:[%s5] sm:$0xff]
    %v227 = vld [vmem:[%s5 + $0x8] sm:$0xff]
    %v228 = vld [vmem:[%s5 + $0x10] sm:$0xff]
    %v229 = vld [vmem:[%s5 + $0x18] sm:$0xff]
    %v230 = vld [vmem:[%s5 + $0x20] sm:$0xff]
    %v231 = vld [vmem:[%s5 + $0x28] sm:$0xff]
    %v232 = vld [vmem:[%s5 + $0x30] sm:$0xff]
    %v233 = vld [vmem:[%s5 + $0x38] sm:$0xff]
    %v234 = vld [vmem:[%s5 + $0x40] sm:$0xff]
    %v235 = vld [vmem:[%s5 + $0x48] sm:$0xff]
    %v236 = vld [vmem:[%s5 + $0x50] sm:$0xff]
    %v237 = vld [vmem:[%s5 + $0x58] sm:$0xff]
    %v238 = vld [vmem:[%s5 + $0x60] sm:$0xff]
    %v239 = vld [vmem:[%s5 + $0x68] sm:$0xff]
    %v240 = vld [vmem:[%s5 + $0x70] sm:$0xff]
    %v241 = vld [vmem:[%s5 + $0x78] sm:$0xff]
    %v242 = vld [vmem:[%s6] sm:$0x1]
    %v244 = vlaneseq
    %v245 = vshrl.u32 %v244, 7
    %v246 = vsub.s32 0, %v245
    %v247 = vrot.slane %v242, %v246
    %249 = vmatprep.subr.mxu0 0.0
    %250 = vmatpush1.msra.mxu0 %v226
    %251 = vmatprep.subr.mxu0 0.0
    %252 = vmatpush1.msra.mxu0 %v227
    %253 = vmatprep.subr.mxu0 0.0
    %254 = vmatpush1.msra.mxu0 %v228
    %255 = vmatprep.subr.mxu0 0.0
    %256 = vmatpush1.msra.mxu0 %v229
    %257 = vmatprep.subr.mxu0 0.0
    %258 = vmatpush1.msra.mxu0 %v230
    %259 = vmatprep.subr.mxu0 0.0
    %260 = vmatpush1.msra.mxu0 %v231
    %261 = vmatprep.subr.mxu0 0.0
    %262 = vmatpush1.msra.mxu0 %v232
    %263 = vmatprep.subr.mxu0 0.0
    %264 = vmatpush1.msra.mxu0 %v233
    %265 = vmatprep.subr.mxu0 0.0
    %266 = vmatpush1.msra.mxu0 %v234
    %267 = vmatprep.subr.mxu0 0.0
    %268 = vmatpush1.msra.mxu0 %v235
    %269 = vmatprep.subr.mxu0 0.0
    %270 = vmatpush1.msra.mxu0 %v236
    %271 = vmatprep.subr.mxu0 0.0
    %272 = vmatpush1.msra.mxu0 %v237
    %273 = vmatprep.subr.mxu0 0.0
    %274 = vmatpush1.msra.mxu0 %v238
    %275 = vmatprep.subr.mxu0 0.0
    %276 = vmatpush1.msra.mxu0 %v239
    %277 = vmatprep.subr.mxu0 0.0
    %278 = vmatpush1.msra.mxu0 %v240
    %279 = vmatprep.subr.mxu0 0.0
    %280 = vmatpush1.msra.mxu0 %v241
    %281 = vmatprep.subr.mxu0 0.0
    %282 = vmatpush1.msra.mxu0 0.0
    %283 = vmatprep.subr.mxu0 0.0
    %284 = vmatpush1.msra.mxu0 0.0
    %285 = vmatprep.subr.mxu0 0.0
    %286 = vmatpush1.msra.mxu0 0.0
    %287 = vmatprep.subr.mxu0 0.0
    %288 = vmatpush1.msra.mxu0 0.0
    %289 = vmatprep.subr.mxu0 0.0
    %290 = vmatpush1.msra.mxu0 0.0
    %291 = vmatprep.subr.mxu0 0.0
    %292 = vmatpush1.msra.mxu0 0.0
    %293 = vmatprep.subr.mxu0 0.0
    %294 = vmatpush1.msra.mxu0 0.0
    %295 = vmatprep.subr.mxu0 0.0
    %296 = vmatpush1.msra.mxu0 0.0
    %297 = vmatprep.subr.mxu0 0.0
    %298 = vmatpush1.msra.mxu0 0.0
    %299 = vmatprep.subr.mxu0 0.0
    %300 = vmatpush1.msra.mxu0 0.0
    %301 = vmatprep.subr.mxu0 0.0
    %302 = vmatpush1.msra.mxu0 0.0
    %303 = vmatprep.subr.mxu0 0.0
    %304 = vmatpush1.msra.mxu0 0.0
    %305 = vmatprep.subr.mxu0 0.0
    %306 = vmatpush1.msra.mxu0 0.0
    %307 = vmatprep.subr.mxu0 0.0
    %308 = vmatpush1.msra.mxu0 0.0
    %309 = vmatprep.subr.mxu0 0.0
    %310 = vmatpush1.msra.mxu0 0.0
    %311 = vmatprep.subr.mxu0 0.0
    %312 = vmatpush1.msra.mxu0 0.0
    %313 = vmatprep.mubr.f32.mxu0 0.0
    %314 = vmatmul.mubr.f32.gmra.mrb[0].mxu0 %v225
    %v315 = vpop.f32.mrb[0].mxu0
    %v316 = vadd.f32 %v247, %v315
    %v317 = vpop.f32.mrb[0].mxu0
    %318 = vdwg.mxu0
    %v319 = vmax.f32 %v316, 0.0
    %v320 = vld [vmem:[%s7] sm:$0xff]
    %v321 = vld [vmem:[%s7 + $0x8] sm:$0xff]
    %v322 = vld [vmem:[%s7 + $0x10] sm:$0xff]
    %v323 = vld [vmem:[%s7 + $0x18] sm:$0xff]
    %v324 = vld [vmem:[%s7 + $0x20] sm:$0xff]
    %v325 = vld [vmem:[%s7 + $0x28] sm:$0xff]
    %v326 = vld [vmem:[%s7 + $0x30] sm:$0xff]
    %v327 = vld [vmem:[%s7 + $0x38] sm:$0xff]
    %v328 = vld [vmem:[%s8] sm:$0x1]
    %v330 = vlaneseq
    %v331 = vshrl.u32 %v330, 7
    %v332 = vsub.s32 0, %v331
    %v333 = vrot.slane %v328, %v332
    %vm335 = vcmask 523264
    %v337 = vsel %vm335, %v319, 0
    %339 = vmatprep.subr.mxu0 0.0
    %340 = vmatpush1.msra.mxu0 %v320
    %341 = vmatprep.subr.mxu0 0.0
    %342 = vmatpush1.msra.mxu0 %v321
    %343 = vmatprep.subr.mxu0 0.0
    %344 = vmatpush1.msra.mxu0 %v322
    %345 = vmatprep.subr.mxu0 0.0
    %346 = vmatpush1.msra.mxu0 %v323
    %347 = vmatprep.subr.mxu0 0.0
    %348 = vmatpush1.msra.mxu0 %v324
    %349 = vmatprep.subr.mxu0 0.0
    %350 = vmatpush1.msra.mxu0 %v325
    %351 = vmatprep.subr.mxu0 0.0
    %352 = vmatpush1.msra.mxu0 %v326
    %353 = vmatprep.subr.mxu0 0.0
    %354 = vmatpush1.msra.mxu0 %v327
    %355 = vmatprep.subr.mxu0 0.0
    %356 = vmatpush1.msra.mxu0 0.0
    %357 = vmatprep.subr.mxu0 0.0
    %358 = vmatpush1.msra.mxu0 0.0
    %359 = vmatprep.subr.mxu0 0.0
    %360 = vmatpush1.msra.mxu0 0.0
    %361 = vmatprep.subr.mxu0 0.0
    %362 = vmatpush1.msra.mxu0 0.0
    %363 = vmatprep.subr.mxu0 0.0
    %364 = vmatpush1.msra.mxu0 0.0
    %365 = vmatprep.subr.mxu0 0.0
    %366 = vmatpush1.msra.mxu0 0.0
    %367 = vmatprep.subr.mxu0 0.0
    %368 = vmatpush1.msra.mxu0 0.0
    %369 = vmatprep.subr.mxu0 0.0
    %370 = vmatpush1.msra.mxu0 0.0
    %371 = vmatprep.subr.mxu0 0.0
    %372 = vmatpush1.msra.mxu0 0.0
    %373 = vmatprep.subr.mxu0 0.0
    %374 = vmatpush1.msra.mxu0 0.0
    %375 = vmatprep.subr.mxu0 0.0
    %376 = vmatpush1.msra.mxu0 0.0
    %377 = vmatprep.subr.mxu0 0.0
    %378 = vmatpush1.msra.mxu0 0.0
    %379 = vmatprep.subr.mxu0 0.0
    %380 = vmatpush1.msra.mxu0 0.0
    %381 = vmatprep.subr.mxu0 0.0
    %382 = vmatpush1.msra.mxu0 0.0
    %383 = vmatprep.subr.mxu0 0.0
    %384 = vmatpush1.msra.mxu0 0.0
    %385 = vmatprep.subr.mxu0 0.0
    %386 = vmatpush1.msra.mxu0 0.0
    %387 = vmatprep.subr.mxu0 0.0
    %388 = vmatpush1.msra.mxu0 0.0
    %389 = vmatprep.subr.mxu0 0.0
    %390 = vmatpush1.msra.mxu0 0.0
    %391 = vmatprep.subr.mxu0 0.0
    %392 = vmatpush1.msra.mxu0 0.0
    %393 = vmatprep.subr.mxu0 0.0
    %394 = vmatpush1.msra.mxu0 0.0
    %395 = vmatprep.subr.mxu0 0.0
    %396 = vmatpush1.msra.mxu0 0.0
    %397 = vmatprep.subr.mxu0 0.0
    %398 = vmatpush1.msra.mxu0 0.0
    %399 = vmatprep.subr.mxu0 0.0
    %400 = vmatpush1.msra.mxu0 0.0
    %401 = vmatprep.subr.mxu0 0.0
    %402 = vmatpush1.msra.mxu0 0.0
    %403 = vmatprep.mubr.f32.mxu0 0.0
    %404 = vmatmul.mubr.f32.gmra.mrb[0].mxu0 %v337
    %v405 = vpop.f32.mrb[0].mxu0
    %v406 = vadd.f32 %v333, %v405
    %v407 = vpop.f32.mrb[0].mxu0
    %408 = vdwg.mxu0
    %409 = vst [vmem:[#allocation5] sm:$0xff] %v406
    // Predicated region
    $region42: #{tpu_custom_call.1} parent=1 // pred_check
      _
    $region43: #{tpu_custom_call.1} parent=1 // pred_check_branch
      %411 = sbr.rel (0) target = $region45
    $region44: #{tpu_custom_call.1} parent=1 // pred_region
      %s413 = ssub.s32 128, 128
      %414 = vsyncadd [#allocation4], %s413
      %s416 = sshll.u32 [#allocation5], 4
      %s417 = int_to_ptr.vmem [resolvable:$true] %s416
      %419 = dma.vmem_to_hbm [thread:$0]  %s417, 128, %s9, [#allocation4]
    $region45: #{tpu_custom_call.1} parent=1 // pred_fallthru
      _
    // Predicated region
    $region46: #{tpu_custom_call.1} parent=1 // pred_check
      _
    $region47: #{tpu_custom_call.1} parent=1 // pred_check_branch
      %421 = sbr.rel (0) target = $region49
    $region48: #{tpu_custom_call.1} parent=1 // pred_region
      %422 = dma.done [#allocation4], 128
    $region49: #{tpu_custom_call.1} parent=1 // pred_fallthru
      _
    %423 = vsyncpa [#allocation3], 1
    %424 = vsyncpa [#allocation4], 1

</llo_original>
